<compile_context>
chip_gen: v5e
topology: v5e:2x2
jax: 0.10.0
libtpu: 0.0.40
codegen_flags: <defaults>
</compile_context>

<pallas_src>
import jax
import jax.numpy as jnp
from jax.experimental import pallas as pl
from jax.experimental.pallas import tpu as pltpu

_LANES = 128                         # vreg lane width
_WIDE = 8 * _LANES                   # 1024: wide lane-dense last dim
_TILE_ROWS = 512                     # (512, 1024) f32 tile = 2 MiB per block
_SMALL_BYTES = 1 << 20               # below ~1 MiB, single block beats grid overhead
_VMEM_LIMIT_BYTES = 32 * 1024 * 1024 # explicit scoped-VMEM budget (safe on v5e/v6e/v7x)


def _copy_kernel(x_ref, o_ref):
    # Single VPU pass-through of the current tile.
    o_ref[...] = x_ref[...]


def _copy_single_block(x2d: jax.Array) -> jax.Array:
    # Tiny inputs: whole array as one VMEM block.  Last two block dims equal the
    # full array dims, so the (8,128) divisibility rule does not apply.
    nbytes = x2d.size * x2d.dtype.itemsize
    return pl.pallas_call(
        _copy_kernel,
        out_shape=jax.ShapeDtypeStruct(x2d.shape, x2d.dtype),
        in_specs=[pl.BlockSpec(memory_space=pltpu.VMEM)],
        out_specs=pl.BlockSpec(memory_space=pltpu.VMEM),
        cost_estimate=pl.CostEstimate(
            flops=0, transcendentals=0, bytes_accessed=2 * nbytes),
    )(x2d)


def _copy_gridded(x2d: jax.Array) -> jax.Array:
    # Larger inputs: 1-D grid of lane-dense tiles -> software-pipelined copy
    # (prefetch i+1 / writeback i-1 overlapped with the pass-through).
    rows, width = x2d.shape
    nbytes = x2d.size * x2d.dtype.itemsize
    grid = (pl.cdiv(rows, _TILE_ROWS),)
    return pl.pallas_call(
        _copy_kernel,
        out_shape=jax.ShapeDtypeStruct(x2d.shape, x2d.dtype),
        grid=grid,
        in_specs=[pl.BlockSpec((_TILE_ROWS, width), lambda i: (i, 0))],
        out_specs=pl.BlockSpec((_TILE_ROWS, width), lambda i: (i, 0)),
        compiler_params=pltpu.CompilerParams(
            # Pure HBM-bandwidth-bound copy: shard grid steps across v7x's two
            # TensorCores; no effect (and harmless) on v5e/v6e.
            dimension_semantics=("parallel",),
            vmem_limit_bytes=_VMEM_LIMIT_BYTES,
        ),
        cost_estimate=pl.CostEstimate(
            flops=0, transcendentals=0, bytes_accessed=2 * nbytes),
    )(x2d)


@jax.jit
def pallas_identity(x: jax.Array) -> jax.Array:
    """Lane-dense, pipelined Pallas identity copy (debug/test path only).

    Plain copy: costs a full HBM read + write of the array (no donation, no
    aliasing); the caller's `x` is never invalidated.
    """
    orig_shape = x.shape
    n = x.size
    flat = x.reshape(n)
    pad = (-n) % _WIDE
    if pad:
        # Pad up to a multiple of 8*128 so the slab is (rows, 1024):
        # full-width unmasked vst stores instead of a (1, n) partial slab.
        flat = jnp.pad(flat, (0, pad))
    x2d = flat.reshape((n + pad) // _WIDE, _WIDE)

    if x2d.size * x2d.dtype.itemsize <= _SMALL_BYTES:
        y2d = _copy_single_block(x2d)
    else:
        y2d = _copy_gridded(x2d)

    y = y2d.reshape(n + pad)
    if pad:
        y = y[:n]
    return y.reshape(orig_shape)


class SmallTextGenerator:
    """JAX/Pallas port of the (empty) PyTorch SmallTextGenerator."""

    def __init__(self, debug_pallas: bool = False) -> None:
        # Reference __init__ declares no parameters.
        self._debug_pallas = debug_pallas

    def forward(self, x):
        # Hot path matches the PyTorch `pass` semantics exactly: no Pallas
        # launch, no host sync, return None.
        if self._debug_pallas:
            # Optional debug touch point: non-donating identity copy, async
            # dispatch only (costs 2x array bytes of HBM traffic when enabled).
            pallas_identity(x)
        return None

    __call__ = forward


if __name__ == "__main__":
    key = jax.random.PRNGKey(0)
    k_small, k_big = jax.random.split(key)

    # Small NCHW-style input consistent with the (empty) module.
    x = jax.random.normal(k_small, (2, 4, 16, 16), dtype=jnp.float32)

    # Tiny input: exercises the single-block lane-dense path.
    y = jax.block_until_ready(pallas_identity(x))
    assert y.shape == x.shape and y.dtype == x.dtype
    assert bool(jnp.array_equal(y, x))

    # Medium, non-multiple-of-1024 input: exercises padding + the gridded,
    # pipelined, parallel-semantics path (including a partial last block).
    z = jax.random.normal(k_big, (600, 1100), dtype=jnp.float32)
    w = jax.block_until_ready(pallas_identity(z))
    assert w.shape == z.shape and w.dtype == z.dtype
    assert bool(jnp.array_equal(w, z))

    model = SmallTextGenerator()
    out = model(x)
    assert out is None  # matches PyTorch forward returning None

    print("KERNEL_OK")
</pallas_src>

<mosaic_0001>
module attributes {stable_mosaic.version = 11 : i64} {
  func.func @_copy_kernel(%arg0: memref<2x1024xf32, #tpu.memory_space<vmem>>, %arg1: memref<2x1024xf32, #tpu.memory_space<vmem>>) attributes {dimension_semantics = [], scalar_prefetch = 0 : i64, scratch_operands = 0 : i64, tpu.core_type = #tpu.core_type<tc>} {
    %c0 = arith.constant 0 : index
    %c0_0 = arith.constant 0 : index
    %0 = vector.load %arg0[%c0, %c0_0] : memref<2x1024xf32, #tpu.memory_space<vmem>>, vector<2x1024xf32>
    %c0_1 = arith.constant 0 : index
    %c0_2 = arith.constant 0 : index
    %1 = vector.load %arg1[%c0_1, %c0_2] : memref<2x1024xf32, #tpu.memory_space<vmem>>, vector<2x1024xf32>
    tpu.vector_store %arg1[%c0_1, %c0_2], %0 {strides = array<i32>} : memref<2x1024xf32, #tpu.memory_space<vmem>>, vector<2x1024xf32>,
    return
  }
}

</mosaic_0001>

<llo_original>
// kernel: pallas_identity.1
$region0: #{pallas_identity.1}
  #allocation0 [shape = 'u32[]', space=smem, size = 0x4, offset = 0x4, fixed_abs, tag = 'smem constant byte address 0x4 - core index']
  #allocation1 [shape = 'u32[72,128]{1,0:T(1,128)}', space=vmem, size = 0x9000, scoped, tag = 'internal scratch']
  %s0 = inlined_call_operand.vmem [shape: f32[2,1024], index: 0, kind: input, shape index: {}]
  %s1 = inlined_call_operand.vmem [shape: f32[2,1024], index: 1, kind: output, shape index: {}]
  %s2 = sld [smem:[#allocation0]]
  $region14: #{pallas_identity.1} parent=0
    _
  %s4 = ssub.s32 1, %s2
  %s5 = scalar_select 0, %s4, %s2
  // Predicated region
  $region2: #{pallas_identity.1} parent=0 // pred_check
    _
  $region3: #{pallas_identity.1} parent=0 // pred_check_branch
    %7 = sbr.rel (0) target = $region5
  $region4: #{pallas_identity.1} parent=0 // pred_region
    _
  $region5: #{pallas_identity.1} parent=0 // pred_fallthru
    _
  %v8 = vld [vmem:[%s0] sm:$0xff]
  %v9 = vld [vmem:[%s0 + $0x8] sm:$0xff]
  %10 = vst [vmem:[%s1] sm:$0xff] %v8
  %11 = vst [vmem:[%s1 + $0x8] sm:$0xff] %v9
  // Predicated region
  $region6: #{pallas_identity.1} parent=0 // pred_check
    _
  $region7: #{pallas_identity.1} parent=0 // pred_check_branch
    %13 = sbr.rel (0) target = $region9
  $region8: #{pallas_identity.1} parent=0 // pred_region
    _
  $region9: #{pallas_identity.1} parent=0 // pred_fallthru
    _
  // Predicated region
  $region10: #{pallas_identity.1} parent=0 // pred_check
    _
  $region11: #{pallas_identity.1} parent=0 // pred_check_branch
    %15 = sbr.rel (0) target = $region13
  $region12: #{pallas_identity.1} parent=0 // pred_region
    _
  $region13: #{pallas_identity.1} parent=0 // pred_fallthru
    _

</llo_original>
